<compile_context>
chip_gen: v5e
topology: v5e:2x2
jax: 0.10.0
libtpu: 0.0.40
codegen_flags: <defaults>
</compile_context>

<pallas_src>
import functools

import jax
import jax.numpy as jnp
from jax import lax
from jax.experimental import pallas as pl
from jax.experimental.pallas import tpu as pltpu

_LANE = 128
_SUBLANE = 8


def _round_up(x, m):
    return (x + m - 1) // m * m


def _policy_kernel(state_ref, wt_ref, bt_ref, wh_ref, bh_ref, out_ref,
                   *, d_total, c_size):
    """Fused policy forward for one batch tile.

    state_ref : [tm, s_pad]   bf16, zero-padded state rows of this tile
    wt_ref    : [s_pad, k_pad] bf16 trunk weights (VMEM-resident across tiles)
    bt_ref    : [1, k_pad]     f32 trunk bias
    wh_ref    : [k_pad, n_pad] bf16 fused head weights (Wd | Wm | Ws | 0)
    bh_ref    : [1, n_pad]     f32 fused head bias
    out_ref   : [tm, n_pad]    f32: lanes [0, d_total)            -> logits
                                     [d_total, d_total+c)         -> mean
                                     [d_total+c, d_total+2c)      -> std
                                     remaining lanes: garbage (sliced off).
    """
    # Trunk: bf16 operands, f32 accumulation on the MXU.
    h = jnp.dot(state_ref[...], wt_ref[...],
                preferred_element_type=jnp.float32)
    h = jnp.maximum(h + bt_ref[...], 0.0)

    # All three heads fused into one MXU matmul -> one lane-dense slab.
    raw = jnp.dot(h.astype(jnp.bfloat16), wh_ref[...],
                  preferred_element_type=jnp.float32)
    raw = raw + bh_ref[...]

    # Per-lane nonlinearity selection (tanh/exp -> EUP, selects -> VPU),
    # single unmasked lane-dense store.  No pad-zeroing select.
    lane = lax.broadcasted_iota(jnp.int32, (1, raw.shape[-1]), 1)
    mean_val = 5.0 * jnp.tanh(raw * 0.2)                  # tanh((.)/5) * 5
    std_val = jnp.exp(jnp.clip(raw, -20.0, 0.5))
    out = jnp.where(lane < d_total, raw,
          jnp.where(lane < d_total + c_size, mean_val, std_val))
    out_ref[...] = out


def prep_params(params, d_action_sizes, c_action_size):
    """One-time host-side packing: fuse the three heads into one weight block,
    zero-pad to sublane/lane multiples, cast weights to bf16 (f32 biases).
    Head output width (n_pad) is decoupled from the hidden padding (k_pad)."""
    d_total = int(sum(d_action_sizes))
    c = int(c_action_size)
    w0 = jnp.asarray(params["w0"], jnp.float32)
    b0 = jnp.asarray(params["b0"], jnp.float32).reshape(1, -1)
    S, H = w0.shape
    n_heads = d_total + 2 * c
    s_pad = _round_up(max(S, _SUBLANE), _SUBLANE)
    k_pad = _round_up(max(H, _LANE), _LANE)        # trunk N / head K
    n_pad = _round_up(max(n_heads, _LANE), _LANE)  # head N / out-slab width
    assert d_total + 2 * c <= n_pad, "head lanes overflow the output slab"

    wt = jnp.zeros((s_pad, k_pad), jnp.float32).at[:S, :H].set(w0)
    bt = jnp.zeros((1, k_pad), jnp.float32).at[:, :H].set(b0)

    w_heads = jnp.concatenate(
        [params["wd"], params["wm"], params["ws"]], axis=1).astype(jnp.float32)
    b_heads = jnp.concatenate(
        [params["bd"].reshape(1, -1),
         params["bm"].reshape(1, -1),
         params["bs"].reshape(1, -1)], axis=1).astype(jnp.float32)
    wh = jnp.zeros((k_pad, n_pad), jnp.float32).at[:H, :n_heads].set(w_heads)
    bh = jnp.zeros((1, n_pad), jnp.float32).at[:, :n_heads].set(b_heads)

    return {
        "wt": wt.astype(jnp.bfloat16), "bt": bt,
        "wh": wh.astype(jnp.bfloat16), "bh": bh,
        "s": S, "s_pad": s_pad, "k_pad": k_pad, "n_pad": n_pad,
        "d_total": d_total, "c": c,
    }


def policy_forward(state, packed, d_action_sizes, *, tm_max=512):
    """state: [B, state_size].  Returns (list of per-branch logits, c_mean,
    c_std) — the parameters of OneHotCategorical and Normal."""
    B = state.shape[0]
    S, s_pad = packed["s"], packed["s_pad"]
    k_pad, n_pad = packed["k_pad"], packed["n_pad"]
    d_total, c = packed["d_total"], packed["c"]

    # Batch tile: multiple of 8 sublanes, capped so double-buffered
    # (state + out) tiles stay far under v7x's 64 MiB VMEM.
    tm = min(int(tm_max), _round_up(B, _SUBLANE))
    b_pad = _round_up(B, tm)

    x = state.astype(jnp.bfloat16)
    if b_pad != B or s_pad != S:
        x = jnp.pad(x, ((0, b_pad - B), (0, s_pad - S)))

    kernel = functools.partial(_policy_kernel, d_total=d_total, c_size=c)

    flops = 2 * b_pad * s_pad * k_pad + 2 * b_pad * k_pad * n_pad
    bytes_accessed = (b_pad * s_pad * 2                 # state (bf16)
                      + s_pad * k_pad * 2 + k_pad * n_pad * 2   # weights (bf16)
                      + (k_pad + n_pad) * 4                     # biases (f32)
                      + b_pad * n_pad * 4)                      # out (f32)

    out = pl.pallas_call(
        kernel,
        out_shape=jax.ShapeDtypeStruct((b_pad, n_pad), jnp.float32),
        grid=(b_pad // tm,),
        in_specs=[
            pl.BlockSpec((tm, s_pad), lambda i: (i, 0)),      # state tile
            pl.BlockSpec((s_pad, k_pad), lambda i: (0, 0)),   # resident weights
            pl.BlockSpec((1, k_pad), lambda i: (0, 0)),
            pl.BlockSpec((k_pad, n_pad), lambda i: (0, 0)),
            pl.BlockSpec((1, n_pad), lambda i: (0, 0)),
        ],
        out_specs=pl.BlockSpec((tm, n_pad), lambda i: (i, 0)),
        compiler_params=pltpu.CompilerParams(
            dimension_semantics=("parallel",)),
        cost_estimate=pl.CostEstimate(
            flops=flops,
            transcendentals=2 * b_pad * n_pad,
            bytes_accessed=bytes_accessed),
    )(x, packed["wt"], packed["bt"], packed["wh"], packed["bh"])

    # Glue (plain JAX): slice the dense slab back into per-head tensors.
    out = out[:B]
    logits = out[:, :d_total]
    mean = out[:, d_total:d_total + c]
    std = out[:, d_total + c:d_total + 2 * c]
    splits = []
    off = 0
    for sz in d_action_sizes:
        splits.append(logits[:, off:off + sz])
        off += sz
    return splits, mean, std


def init_params(key, state_size, hidden, d_total, c_size):
    ks = jax.random.split(key, 8)
    scale = 0.1
    return {
        "w0": scale * jax.random.normal(ks[0], (state_size, hidden), jnp.float32),
        "b0": scale * jax.random.normal(ks[1], (1, hidden), jnp.float32),
        "wd": scale * jax.random.normal(ks[2], (hidden, d_total), jnp.float32),
        "bd": scale * jax.random.normal(ks[3], (1, d_total), jnp.float32),
        "wm": scale * jax.random.normal(ks[4], (hidden, c_size), jnp.float32),
        "bm": scale * jax.random.normal(ks[5], (1, c_size), jnp.float32),
        "ws": scale * jax.random.normal(ks[6], (hidden, c_size), jnp.float32),
        "bs": scale * jax.random.normal(ks[7], (1, c_size), jnp.float32),
    }


if __name__ == "__main__":
    # Small shapes consistent with the module's constructor signature.
    batch = 8
    state_size = 32
    d_action_sizes = [3, 4]      # two discrete action branches
    c_action_size = 4
    hidden = 32
    d_total = sum(d_action_sizes)

    key = jax.random.PRNGKey(0)
    k_state, k_params = jax.random.split(key)
    state = jax.random.normal(k_state, (batch, state_size), jnp.float32)
    params = init_params(k_params, state_size, hidden, d_total, c_action_size)

    packed = prep_params(params, d_action_sizes, c_action_size)   # one-time pack
    d_logits_list, c_mean, c_std = policy_forward(state, packed, d_action_sizes)
    jax.block_until_ready((d_logits_list, c_mean, c_std))

    # Reference in plain JAX mirroring the kernel's bf16-operand / f32-accumulate
    # numerics (weights and activations rounded to bf16 before each matmul).
    def _bf(x):
        return x.astype(jnp.bfloat16).astype(jnp.float32)

    h = jnp.maximum(_bf(state) @ _bf(params["w0"]) + params["b0"], 0.0)
    hb = _bf(h)
    ref_logits = hb @ _bf(params["wd"]) + params["bd"]
    ref_mean = jnp.tanh((hb @ _bf(params["wm"]) + params["bm"]) / 5.0) * 5.0
    ref_std = jnp.exp(jnp.clip(hb @ _bf(params["ws"]) + params["bs"], -20.0, 0.5))
    assert jnp.allclose(jnp.concatenate(d_logits_list, axis=-1), ref_logits,
                        atol=1e-3, rtol=1e-3)
    assert jnp.allclose(c_mean, ref_mean, atol=1e-3, rtol=1e-3)
    assert jnp.allclose(c_std, ref_std, atol=1e-3, rtol=1e-3)

    # TODO(synk): ModelBasePolicy.forward itself raises NotImplementedError;
    # OneHotCategorical/Normal object construction and sampling are left to the
    # caller — the kernel produces their parameters (logits, mean, std).
    print("KERNEL_OK")
</pallas_src>

<mosaic_0001>
module attributes {stable_mosaic.version = 11 : i64} {
  func.func @_policy_kernel(%arg0: i32, %arg1: memref<8x32xbf16, #tpu.memory_space<vmem>>, %arg2: memref<32x128xbf16, #tpu.memory_space<vmem>>, %arg3: memref<1x128xf32, #tpu.memory_space<vmem>>, %arg4: memref<128x128xbf16, #tpu.memory_space<vmem>>, %arg5: memref<1x128xf32, #tpu.memory_space<vmem>>, %arg6: memref<8x128xf32, #tpu.memory_space<vmem>>) attributes {dimension_semantics = [#tpu.dimension_semantics<parallel>], iteration_bounds = array<i64: 1>, scalar_prefetch = 0 : i64, scratch_operands = 0 : i64, tpu.core_type = #tpu.core_type<tc>, window_params = [{transform_indices = @transform_0, window_bounds = array<i64: 8, 32>}, {pipeline_mode = #tpu.pipeline_mode<synchronous>, transform_indices = @transform_1, window_bounds = array<i64: 32, 128>}, {pipeline_mode = #tpu.pipeline_mode<synchronous>, transform_indices = @transform_2, window_bounds = array<i64: 1, 128>}, {pipeline_mode = #tpu.pipeline_mode<synchronous>, transform_indices = @transform_3, window_bounds = array<i64: 128, 128>}, {pipeline_mode = #tpu.pipeline_mode<synchronous>, transform_indices = @transform_4, window_bounds = array<i64: 1, 128>}, {transform_indices = @transform_5, window_bounds = array<i64: 8, 128>}]} {
    %c0 = arith.constant 0 : index
    %c0_0 = arith.constant 0 : index
    %0 = vector.load %arg1[%c0, %c0_0] : memref<8x32xbf16, #tpu.memory_space<vmem>>, vector<8x32xbf16>
    %c0_1 = arith.constant 0 : index
    %c0_2 = arith.constant 0 : index
    %1 = vector.load %arg2[%c0_1, %c0_2] : memref<32x128xbf16, #tpu.memory_space<vmem>>, vector<32x128xbf16>
    %cst = arith.constant dense<0.000000e+00> : vector<8x128xf32>
    %2 = tpu.matmul %0, %1, %cst {dimension_numbers = #tpu.dot_dimension_numbers<[1], [0], [0], [1], [0, 0, 1, 1], [], []>} : vector<8x32xbf16>, vector<32x128xbf16>, vector<8x128xf32> -> vector<8x128xf32>
    %c0_3 = arith.constant 0 : index
    %c0_4 = arith.constant 0 : index
    %3 = vector.load %arg3[%c0_3, %c0_4] : memref<1x128xf32, #tpu.memory_space<vmem>>, vector<1x128xf32>
    %4 = vector.broadcast %3 : vector<1x128xf32> to vector<8x128xf32>
    %5 = arith.addf %2, %4 : vector<8x128xf32>
    %cst_5 = arith.constant 0.000000e+00 : f32
    %6 = vector.broadcast %cst_5 : f32 to vector<8x128xf32>
    %7 = arith.maximumf %5, %6 : vector<8x128xf32>
    %8 = arith.truncf %7 : vector<8x128xf32> to vector<8x128xbf16>
    %c0_6 = arith.constant 0 : index
    %c0_7 = arith.constant 0 : index
    %9 = vector.load %arg4[%c0_6, %c0_7] : memref<128x128xbf16, #tpu.memory_space<vmem>>, vector<128x128xbf16>
    %cst_8 = arith.constant dense<0.000000e+00> : vector<8x128xf32>
    %10 = tpu.matmul %8, %9, %cst_8 {dimension_numbers = #tpu.dot_dimension_numbers<[1], [0], [0], [1], [0, 0, 1, 1], [], []>} : vector<8x128xbf16>, vector<128x128xbf16>, vector<8x128xf32> -> vector<8x128xf32>
    %c0_9 = arith.constant 0 : index
    %c0_10 = arith.constant 0 : index
    %11 = vector.load %arg5[%c0_9, %c0_10] : memref<1x128xf32, #tpu.memory_space<vmem>>, vector<1x128xf32>
    %12 = vector.broadcast %11 : vector<1x128xf32> to vector<8x128xf32>
    %13 = arith.addf %10, %12 : vector<8x128xf32>
    %14 = tpu.iota {dimensions = array<i32: 1>} : vector<1x128xi32>
    %cst_11 = arith.constant 2.000000e-01 : f32
    %15 = vector.broadcast %cst_11 : f32 to vector<8x128xf32>
    %16 = arith.mulf %13, %15 : vector<8x128xf32>
    %17 = math.tanh %16 : vector<8x128xf32>
    %cst_12 = arith.constant 5.000000e+00 : f32
    %18 = vector.broadcast %cst_12 : f32 to vector<8x128xf32>
    %19 = arith.mulf %18, %17 : vector<8x128xf32>
    %cst_13 = arith.constant -2.000000e+01 : f32
    %cst_14 = arith.constant 5.000000e-01 : f32
    %20 = vector.broadcast %cst_13 : f32 to vector<8x128xf32>
    %21 = arith.maximumf %20, %13 : vector<8x128xf32>
    %22 = vector.broadcast %cst_14 : f32 to vector<8x128xf32>
    %23 = arith.minimumf %22, %21 : vector<8x128xf32>
    %24 = math.exp %23 : vector<8x128xf32>
    %c7_i32 = arith.constant 7 : i32
    %25 = vector.broadcast %c7_i32 : i32 to vector<1x128xi32>
    %26 = arith.cmpi slt, %14, %25 : vector<1x128xi32>
    %c11_i32 = arith.constant 11 : i32
    %27 = vector.broadcast %c11_i32 : i32 to vector<1x128xi32>
    %28 = arith.cmpi slt, %14, %27 : vector<1x128xi32>
    %29 = vector.shape_cast %28 : vector<1x128xi1> to vector<1x128xi1>
    %30 = vector.broadcast %29 : vector<1x128xi1> to vector<8x128xi1>
    %31 = arith.select %30, %19, %24 : vector<8x128xi1>, vector<8x128xf32>
    %32 = vector.shape_cast %26 : vector<1x128xi1> to vector<1x128xi1>
    %33 = vector.broadcast %32 : vector<1x128xi1> to vector<8x128xi1>
    %34 = arith.select %33, %13, %31 : vector<8x128xi1>, vector<8x128xf32>
    %c0_15 = arith.constant 0 : index
    %c0_16 = arith.constant 0 : index
    %35 = vector.load %arg6[%c0_15, %c0_16] : memref<8x128xf32, #tpu.memory_space<vmem>>, vector<8x128xf32>
    tpu.vector_store %arg6[%c0_15, %c0_16], %34 {strides = array<i32>} : memref<8x128xf32, #tpu.memory_space<vmem>>, vector<8x128xf32>,
    return
  }
  func.func @transform_0(%arg0: i32) -> (i32, i32) {
    %c0_i32 = arith.constant 0 : i32
    %c0_i32_0 = arith.constant 0 : i32
    return %arg0, %c0_i32 : i32, i32
  }
  func.func @transform_1(%arg0: i32) -> (i32, i32) {
    %c0_i32 = arith.constant 0 : i32
    %c0_i32_0 = arith.constant 0 : i32
    %c0_i32_1 = arith.constant 0 : i32
    return %c0_i32, %c0_i32_0 : i32, i32
  }
  func.func @transform_2(%arg0: i32) -> (i32, i32) {
    %c0_i32 = arith.constant 0 : i32
    %c0_i32_0 = arith.constant 0 : i32
    %c0_i32_1 = arith.constant 0 : i32
    return %c0_i32, %c0_i32_0 : i32, i32
  }
  func.func @transform_3(%arg0: i32) -> (i32, i32) {
    %c0_i32 = arith.constant 0 : i32
    %c0_i32_0 = arith.constant 0 : i32
    %c0_i32_1 = arith.constant 0 : i32
    return %c0_i32, %c0_i32_0 : i32, i32
  }
  func.func @transform_4(%arg0: i32) -> (i32, i32) {
    %c0_i32 = arith.constant 0 : i32
    %c0_i32_0 = arith.constant 0 : i32
    %c0_i32_1 = arith.constant 0 : i32
    return %c0_i32, %c0_i32_0 : i32, i32
  }
  func.func @transform_5(%arg0: i32) -> (i32, i32) {
    %c0_i32 = arith.constant 0 : i32
    %c0_i32_0 = arith.constant 0 : i32
    return %arg0, %c0_i32 : i32, i32
  }
}

</mosaic_0001>

<llo_original>
// kernel: tpu_custom_call.1
$region0: #{tpu_custom_call.1}
  #allocation0 [shape = 'u32[]', space=smem, size = 0x4, offset = 0x4, fixed_abs, tag = 'smem constant byte address 0x4 - core index']
  #allocation1 [shape = 'u32[72,128]{1,0:T(1,128)}', space=vmem, size = 0x9000, scoped, tag = 'internal scratch']
  %s0 = inlined_call_operand.hbm [shape: bf16[8,32], index: 0, kind: input, shape index: {}]
  %s1 = inlined_call_operand.hbm [shape: bf16[32,128], index: 1, kind: input, shape index: {}]
  %s2 = inlined_call_operand.vmem [shape: f32[1,128], index: 2, kind: input, shape index: {}]
  %s3 = inlined_call_operand.hbm [shape: bf16[128,128], index: 3, kind: input, shape index: {}]
  %s4 = inlined_call_operand.vmem [shape: f32[1,128], index: 4, kind: input, shape index: {}]
  %s5 = inlined_call_operand.hbm [shape: f32[8,128], index: 5, kind: output, shape index: {}]
  %s6 = sld [smem:[#allocation0]]
  $region42: #{tpu_custom_call.1} parent=0
    _
  %s8 = ssub.s32 1, %s6
  %s9 = scalar_select 0, %s8, %s6
  $region1: #{tpu_custom_call.1} parent=0
    #allocation2 [shape = 'u8[2048]{0}', space=vmem, size = 0x800, scoped, tag = 'input window, operand 0, single buffered']
    #allocation3 [shape = 's32[1]{0}', space=sflag, size = 0x4, scoped, tag = 'scoped memory for tpu_custom_call.1']
    #allocation4 [shape = 's32[1]{0}', space=sflag, size = 0x4, scoped, tag = 'scoped memory for tpu_custom_call.1']
    #allocation5 [shape = 'u8[8192]{0}', space=vmem, size = 0x2000, scoped, tag = 'input window, operand 1, single buffered']
    #allocation6 [shape = 's32[1]{0}', space=sflag, size = 0x4, scoped, tag = 'scoped memory for tpu_custom_call.1']
    #allocation7 [shape = 'u8[32768]{0}', space=vmem, size = 0x8000, scoped, tag = 'input window, operand 3, single buffered']
    #allocation8 [shape = 'u8[4096]{0}', space=vmem, size = 0x1000, scoped, tag = 'output window, operand 0, single buffered']
    %10 = vsyncpa [#allocation3], 0
    %11 = vsyncpa [#allocation6], 0
    %12 = vsyncpa [#allocation4], 0
    // Predicated region
    $region2: #{tpu_custom_call.1} parent=1 // pred_check
      _
    $region3: #{tpu_custom_call.1} parent=1 // pred_check_branch
      %14 = sbr.rel (0) target = $region5
    $region4: #{tpu_custom_call.1} parent=1 // pred_region
      %16 = vsyncadd [#allocation3], 0
      %s18 = sshll.u32 %s0, 4
      %s19 = int_to_ptr.hbm [resolvable:$true] %s18
      %s20 = sshll.u32 [#allocation2], 4
      %s21 = int_to_ptr.vmem [resolvable:$true] %s20
      %23 = dma.hbm_to_vmem [thread:$0]  %s19, 64, %s21, [#allocation3]
    $region5: #{tpu_custom_call.1} parent=1 // pred_fallthru
      _
    // Predicated region
    $region6: #{tpu_custom_call.1} parent=1 // pred_check
      _
    $region7: #{tpu_custom_call.1} parent=1 // pred_check_branch
      %25 = sbr.rel (0) target = $region9
    $region8: #{tpu_custom_call.1} parent=1 // pred_region
      %27 = vsyncadd [#allocation6], 0
      %s28 = sshll.u32 %s1, 4
      %s29 = int_to_ptr.hbm [resolvable:$true] %s28
      %s30 = sshll.u32 [#allocation5], 4
      %s31 = int_to_ptr.vmem [resolvable:$true] %s30
      %36 = dma.hbm_to_vmem [thread:$0]  %s29, 256, %s31, [#allocation6], 64, 64, 4
    $region9: #{tpu_custom_call.1} parent=1 // pred_fallthru
      _
    // Predicated region
    $region10: #{tpu_custom_call.1} parent=1 // pred_check
      _
    $region11: #{tpu_custom_call.1} parent=1 // pred_check_branch
      %38 = sbr.rel (0) target = $region13
    $region12: #{tpu_custom_call.1} parent=1 // pred_region
      _
    $region13: #{tpu_custom_call.1} parent=1 // pred_fallthru
      _
    // Predicated region
    $region14: #{tpu_custom_call.1} parent=1 // pred_check
      _
    $region15: #{tpu_custom_call.1} parent=1 // pred_check_branch
      %40 = sbr.rel (0) target = $region17
    $region16: #{tpu_custom_call.1} parent=1 // pred_region
      %42 = vsyncadd [#allocation6], 0
      %s43 = sshll.u32 %s3, 4
      %s44 = int_to_ptr.hbm [resolvable:$true] %s43
      %s45 = sshll.u32 [#allocation7], 4
      %s46 = int_to_ptr.vmem [resolvable:$true] %s45
      %51 = dma.hbm_to_vmem [thread:$0]  %s44, 1024, %s46, [#allocation6], 64, 64, 4
    $region17: #{tpu_custom_call.1} parent=1 // pred_fallthru
      _
    // Predicated region
    $region18: #{tpu_custom_call.1} parent=1 // pred_check
      _
    $region19: #{tpu_custom_call.1} parent=1 // pred_check_branch
      %53 = sbr.rel (0) target = $region21
    $region20: #{tpu_custom_call.1} parent=1 // pred_region
      _
    $region21: #{tpu_custom_call.1} parent=1 // pred_fallthru
      _
    // Predicated region
    $region22: #{tpu_custom_call.1} parent=1 // pred_check
      _
    $region23: #{tpu_custom_call.1} parent=1 // pred_check_branch
      %55 = sbr.rel (0) target = $region25
    $region24: #{tpu_custom_call.1} parent=1 // pred_region
      %57 = dma.done [#allocation3], 64
    $region25: #{tpu_custom_call.1} parent=1 // pred_fallthru
      _
    // Predicated region
    $region26: #{tpu_custom_call.1} parent=1 // pred_check
      _
    $region27: #{tpu_custom_call.1} parent=1 // pred_check_branch
      %59 = sbr.rel (0) target = $region29
    $region28: #{tpu_custom_call.1} parent=1 // pred_region
      %61 = dma.done [#allocation6], 256
    $region29: #{tpu_custom_call.1} parent=1 // pred_fallthru
      _
    // Predicated region
    $region30: #{tpu_custom_call.1} parent=1 // pred_check
      _
    $region31: #{tpu_custom_call.1} parent=1 // pred_check_branch
      %63 = sbr.rel (0) target = $region33
    $region32: #{tpu_custom_call.1} parent=1 // pred_region
      %65 = dma.done [#allocation6], 1024
    $region33: #{tpu_custom_call.1} parent=1 // pred_fallthru
      _
    %v67 = vld [vmem:[#allocation2] sm:$0xf]
    %v68 = vld [vmem:[#allocation5] sm:$0xf]
    %v69 = vld [vmem:[#allocation5 + $0x4] sm:$0xf]
    %v70 = vld [vmem:[#allocation5 + $0x8] sm:$0xf]
    %v71 = vld [vmem:[#allocation5 + $0xc] sm:$0xf]
    %v72 = vld [vmem:[%s2] sm:$0x1]
    %v74 = vperm.slane %v72, 0
    %v80 = vunpack.c.l.b16 %v68
    %v81 = vunpack.c.l.b16 %v69
    %v82 = vunpack.c.l.b16 %v70
    %v83 = vunpack.c.l.b16 %v71
    %v84 = vpack.c.b16 %v81, %v80
    %v85 = vpack.c.b16 %v83, %v82
    %vm88 = vcmask 261120
    %v90 = vsel %vm88, %v67, 0
    %92 = vmatpush.bf16.msra.mxu0 0
    %93 = vmatpush.bf16.msra.mxu0 0
    %94 = vmatpush.bf16.msra.mxu0 0
    %95 = vmatpush.bf16.msra.mxu0 0
    %96 = vmatpush.bf16.msra.mxu0 0
    %97 = vmatpush.bf16.msra.mxu0 0
    %98 = vmatpush.bf16.msra.mxu0 %v85
    %99 = vmatpush.bf16.msra.mxu0 %v84
    %100 = vmatmul.bf16.gmra.mxu0 %v90
    %v101 = vpop.f32.mrf.mxu0
    %v102 = vadd.f32 %v74, %v101
    %v103 = vpop.f32.mrf.mxu0
    %104 = vdwg.mxu0
    %v105 = vmax.f32 %v102, 0.0
    %v106 = vpack.c.bf16 %v105, %v105
    %v107 = vld [vmem:[#allocation7] sm:$0xf]
    %v108 = vld [vmem:[#allocation7 + $0x4] sm:$0xf]
    %v109 = vld [vmem:[#allocation7 + $0x8] sm:$0xf]
    %v110 = vld [vmem:[#allocation7 + $0xc] sm:$0xf]
    %v111 = vld [vmem:[#allocation7 + $0x10] sm:$0xf]
    %v112 = vld [vmem:[#allocation7 + $0x14] sm:$0xf]
    %v113 = vld [vmem:[#allocation7 + $0x18] sm:$0xf]
    %v114 = vld [vmem:[#allocation7 + $0x1c] sm:$0xf]
    %v115 = vld [vmem:[#allocation7 + $0x20] sm:$0xf]
    %v116 = vld [vmem:[#allocation7 + $0x24] sm:$0xf]
    %v117 = vld [vmem:[#allocation7 + $0x28] sm:$0xf]
    %v118 = vld [vmem:[#allocation7 + $0x2c] sm:$0xf]
    %v119 = vld [vmem:[#allocation7 + $0x30] sm:$0xf]
    %v120 = vld [vmem:[#allocation7 + $0x34] sm:$0xf]
    %v121 = vld [vmem:[#allocation7 + $0x38] sm:$0xf]
    %v122 = vld [vmem:[#allocation7 + $0x3c] sm:$0xf]
    %v123 = vld [vmem:[%s4] sm:$0x1]
    %v125 = vperm.slane %v123, 0
    %v143 = vunpack.c.l.b16 %v107
    %v144 = vunpack.c.l.b16 %v108
    %v145 = vunpack.c.l.b16 %v109
    %v146 = vunpack.c.l.b16 %v110
    %v147 = vunpack.c.l.b16 %v111
    %v148 = vunpack.c.l.b16 %v112
    %v149 = vunpack.c.l.b16 %v113
    %v150 = vunpack.c.l.b16 %v114
    %v151 = vunpack.c.l.b16 %v115
    %v152 = vunpack.c.l.b16 %v116
    %v153 = vunpack.c.l.b16 %v117
    %v154 = vunpack.c.l.b16 %v118
    %v155 = vunpack.c.l.b16 %v119
    %v156 = vunpack.c.l.b16 %v120
    %v157 = vunpack.c.l.b16 %v121
    %v158 = vunpack.c.l.b16 %v122
    %v159 = vpack.c.b16 %v144, %v143
    %v160 = vpack.c.b16 %v146, %v145
    %v161 = vpack.c.b16 %v148, %v147
    %v162 = vpack.c.b16 %v150, %v149
    %v163 = vpack.c.b16 %v152, %v151
    %v164 = vpack.c.b16 %v154, %v153
    %v165 = vpack.c.b16 %v156, %v155
    %v166 = vpack.c.b16 %v158, %v157
    %175 = vmatpush.bf16.msra.mxu0 %v166
    %176 = vmatpush.bf16.msra.mxu0 %v165
    %177 = vmatpush.bf16.msra.mxu0 %v164
    %178 = vmatpush.bf16.msra.mxu0 %v163
    %179 = vmatpush.bf16.msra.mxu0 %v162
    %180 = vmatpush.bf16.msra.mxu0 %v161
    %181 = vmatpush.bf16.msra.mxu0 %v160
    %182 = vmatpush.bf16.msra.mxu0 %v159
    %183 = vmatmul.bf16.gmra.mxu0 %v106
    %v184 = vpop.f32.mrf.mxu0
    %v185 = vadd.f32 %v125, %v184
    %v186 = vpop.f32.mrf.mxu0
    %187 = vdwg.mxu0
    %v188 = vlaneseq
    %v189 = vand.u32 %v188, 127
    %v190 = vmul.f32 %v185, 0.2
    %v191 = vtanh.pop %v190
    %v192 = vmul.f32 %v191, 5.0
    %v193 = vmax.f32 %v185, -20.0
    %v194 = vmin.f32 %v193, 0.5
    %v195 = vmul.f32 %v194, 1.442695
    %v196 = vpow.pop %v195
    %vm197 = vcmp.lt.s32.totalorder %v189, 7
    %vm198 = vcmp.lt.s32.totalorder %v189, 11
    %v199 = vsel %vm198, 1, 0
    %vm200 = vcmp.eq.s32.totalorder %v199, 1
    %v201 = vsel %vm200, %v192, %v196
    %v202 = vsel %vm197, 1, 0
    %vm203 = vcmp.eq.s32.totalorder %v202, 1
    %v204 = vsel %vm203, %v185, %v201
    %205 = vst [vmem:[#allocation8] sm:$0xff] %v204
    // Predicated region
    $region34: #{tpu_custom_call.1} parent=1 // pred_check
      _
    $region35: #{tpu_custom_call.1} parent=1 // pred_check_branch
      %207 = sbr.rel (0) target = $region37
    $region36: #{tpu_custom_call.1} parent=1 // pred_region
      %209 = vsyncadd [#allocation4], 0
      %s211 = sshll.u32 [#allocation8], 4
      %s212 = int_to_ptr.vmem [resolvable:$true] %s211
      %s213 = sshll.u32 %s5, 4
      %s214 = int_to_ptr.hbm [resolvable:$true] %s213
      %216 = dma.vmem_to_hbm [thread:$0]  %s212, 128, %s214, [#allocation4]
    $region37: #{tpu_custom_call.1} parent=1 // pred_fallthru
      _
    // Predicated region
    $region38: #{tpu_custom_call.1} parent=1 // pred_check
      _
    $region39: #{tpu_custom_call.1} parent=1 // pred_check_branch
      %218 = sbr.rel (0) target = $region41
    $region40: #{tpu_custom_call.1} parent=1 // pred_region
      %220 = dma.done [#allocation4], 128
    $region41: #{tpu_custom_call.1} parent=1 // pred_fallthru
      _
    %221 = vsyncpa [#allocation3], 1
    %222 = vsyncpa [#allocation6], 1
    %223 = vsyncpa [#allocation4], 1

</llo_original>
